<compile_context>
chip_gen: v6e
topology: v6e:2x2x1
jax: 0.10.0
libtpu: 0.0.40
codegen_flags: <defaults>
</compile_context>

<pallas_src>
import jax
import jax.numpy as jnp
from jax.experimental import pallas as pl
from jax.experimental.pallas import tpu as pltpu

IN_FEATURES = [2, 4, 8, 16, 32, 64, 128]           # Linear(x, 2x) for each x
OUT_FEATURES = [2 * x for x in IN_FEATURES]         # ... -> final 256
SUB = 8                                             # sublane-aligned rows
LANE = 128                                          # lane-aligned feature pad
FINAL = OUT_FEATURES[-1]                            # 256


def _mlp_chain_kernel(x_ref, wstack_ref, w7_ref, bstack_ref, b7_ref, o_ref):
    """All operands VMEM-resident; Python loop unrolls at trace time."""
    h = x_ref[...]                                              # (8, 128) f32
    for i in range(6):                                          # 6 MXU matmuls
        h = (
            jnp.dot(h, wstack_ref[i], preferred_element_type=jnp.float32)
            + bstack_ref[i : i + 1, :]                          # (1, 128) bcast
        )
    h = (
        jnp.dot(h, w7_ref[...], preferred_element_type=jnp.float32)
        + b7_ref[...]                                           # (1, 256) bcast
    )
    # o1 + o2 with o2 == o1 (same Linear modules in both torch loops).
    o_ref[...] = (h + h).astype(o_ref.dtype)


def _pad_to(arr, shape):
    return jnp.pad(arr, [(0, s - d) for d, s in zip(arr.shape, shape)])


def model_forward(x, weights, biases):
    """Pallas equivalent of ModelWithDifferentTensorSizes.forward.

    x       : (2,) f32
    weights : list of (out_k, in_k) torch-layout weight matrices
    biases  : list of (out_k,) bias vectors
    """
    assert x.ndim == 1 and x.shape[0] == IN_FEATURES[0]

    # Lane-dense, zero-padded operands.
    x_pad = (
        jnp.zeros((SUB, LANE), jnp.float32)
        .at[0, : x.shape[0]]
        .set(x.astype(jnp.float32))
    )

    # Layers 1..6: stack into single (6,128,128) weight and (8,128) bias slabs.
    w_stack = jnp.stack(
        [_pad_to(W.T.astype(jnp.float32), (LANE, LANE)) for W in weights[:-1]]
    )                                                           # (6, 128, 128)
    b_stack = jnp.zeros((SUB, LANE), jnp.float32)
    for i, b in enumerate(biases[:-1]):
        b_stack = b_stack.at[i, : b.shape[0]].set(b.astype(jnp.float32))

    # Layer 7: (128, 256) weight, (1, 256) bias — already lane-aligned.
    w7 = _pad_to(weights[-1].T.astype(jnp.float32), (LANE, FINAL))
    b7 = biases[-1].astype(jnp.float32)[None, :]

    args = (x_pad, w_stack, w7, b_stack, b7)

    out_pad = pl.pallas_call(
        _mlp_chain_kernel,
        out_shape=jax.ShapeDtypeStruct((SUB, FINAL), jnp.float32),
        in_specs=[pl.BlockSpec(memory_space=pltpu.VMEM)] * len(args),
        out_specs=pl.BlockSpec(memory_space=pltpu.VMEM),
        cost_estimate=pl.CostEstimate(
            flops=2 * SUB * (6 * LANE * LANE + LANE * FINAL),
            transcendentals=0,
            bytes_accessed=4 * (sum(a.size for a in args) + SUB * FINAL),
        ),
    )(*args)

    return out_pad[0, :FINAL]                                   # (256,)


def _reference(x, weights, biases):
    def chain(h):
        for W, b in zip(weights, biases):
            h = h @ W.T + b
        return h
    return chain(x) + chain(x)


if __name__ == "__main__":
    key = jax.random.PRNGKey(0)
    keys = jax.random.split(key, 2 * len(IN_FEATURES) + 1)

    x = jax.random.normal(keys[0], (IN_FEATURES[0],), dtype=jnp.float32)

    weights, biases = [], []
    for li, (fi, fo) in enumerate(zip(IN_FEATURES, OUT_FEATURES)):
        bound = 1.0 / (fi ** 0.5)                   # ~ torch.nn.Linear default init
        W = jax.random.uniform(keys[1 + 2 * li], (fo, fi),
                               minval=-bound, maxval=bound, dtype=jnp.float32)
        b = jax.random.uniform(keys[2 + 2 * li], (fo,),
                               minval=-bound, maxval=bound, dtype=jnp.float32)
        weights.append(W)
        biases.append(b)

    fwd = jax.jit(model_forward)
    out = fwd(x, weights, biases)
    jax.block_until_ready(out)

    ref = _reference(x, weights, biases)
    assert out.shape == (FINAL,) and out.dtype == jnp.float32
    assert jnp.allclose(out, ref, rtol=1e-3, atol=1e-3), "mismatch vs reference"
    print("KERNEL_OK")
</pallas_src>

<mosaic_0001>
module attributes {stable_mosaic.version = 11 : i64} {
  func.func @_mlp_chain_kernel(%arg0: memref<8x128xf32, #tpu.memory_space<vmem>>, %arg1: memref<6x128x128xf32, #tpu.memory_space<vmem>>, %arg2: memref<128x256xf32, #tpu.memory_space<vmem>>, %arg3: memref<8x128xf32, #tpu.memory_space<vmem>>, %arg4: memref<1x256xf32, #tpu.memory_space<vmem>>, %arg5: memref<8x256xf32, #tpu.memory_space<vmem>>) attributes {dimension_semantics = [], scalar_prefetch = 0 : i64, scratch_operands = 0 : i64, tpu.core_type = #tpu.core_type<tc>} {
    %c0 = arith.constant 0 : index
    %c0_0 = arith.constant 0 : index
    %0 = vector.load %arg0[%c0, %c0_0] : memref<8x128xf32, #tpu.memory_space<vmem>>, vector<8x128xf32>
    %c0_1 = arith.constant 0 : index
    %c0_2 = arith.constant 0 : index
    %c0_3 = arith.constant 0 : index
    %1 = vector.load %arg1[%c0_1, %c0_2, %c0_3] : memref<6x128x128xf32, #tpu.memory_space<vmem>>, vector<1x128x128xf32>
    %2 = vector.shape_cast %1 : vector<1x128x128xf32> to vector<128x128xf32>
    %cst = arith.constant dense<0.000000e+00> : vector<8x128xf32>
    %3 = tpu.matmul %0, %2, %cst {dimension_numbers = #tpu.dot_dimension_numbers<[1], [0], [0], [1], [0, 0, 1, 1], [], []>} : vector<8x128xf32>, vector<128x128xf32>, vector<8x128xf32> -> vector<8x128xf32>
    %c0_4 = arith.constant 0 : index
    %c0_5 = arith.constant 0 : index
    %4 = vector.load %arg3[%c0_4, %c0_5] : memref<8x128xf32, #tpu.memory_space<vmem>>, vector<1x128xf32>
    %5 = vector.broadcast %4 : vector<1x128xf32> to vector<8x128xf32>
    %6 = arith.addf %3, %5 : vector<8x128xf32>
    %c1 = arith.constant 1 : index
    %c0_6 = arith.constant 0 : index
    %c0_7 = arith.constant 0 : index
    %7 = vector.load %arg1[%c1, %c0_6, %c0_7] : memref<6x128x128xf32, #tpu.memory_space<vmem>>, vector<1x128x128xf32>
    %8 = vector.shape_cast %7 : vector<1x128x128xf32> to vector<128x128xf32>
    %cst_8 = arith.constant dense<0.000000e+00> : vector<8x128xf32>
    %9 = tpu.matmul %6, %8, %cst_8 {dimension_numbers = #tpu.dot_dimension_numbers<[1], [0], [0], [1], [0, 0, 1, 1], [], []>} : vector<8x128xf32>, vector<128x128xf32>, vector<8x128xf32> -> vector<8x128xf32>
    %c1_9 = arith.constant 1 : index
    %c0_10 = arith.constant 0 : index
    %10 = vector.load %arg3[%c1_9, %c0_10] : memref<8x128xf32, #tpu.memory_space<vmem>>, vector<1x128xf32>
    %11 = vector.broadcast %10 : vector<1x128xf32> to vector<8x128xf32>
    %12 = arith.addf %9, %11 : vector<8x128xf32>
    %c2 = arith.constant 2 : index
    %c0_11 = arith.constant 0 : index
    %c0_12 = arith.constant 0 : index
    %13 = vector.load %arg1[%c2, %c0_11, %c0_12] : memref<6x128x128xf32, #tpu.memory_space<vmem>>, vector<1x128x128xf32>
    %14 = vector.shape_cast %13 : vector<1x128x128xf32> to vector<128x128xf32>
    %cst_13 = arith.constant dense<0.000000e+00> : vector<8x128xf32>
    %15 = tpu.matmul %12, %14, %cst_13 {dimension_numbers = #tpu.dot_dimension_numbers<[1], [0], [0], [1], [0, 0, 1, 1], [], []>} : vector<8x128xf32>, vector<128x128xf32>, vector<8x128xf32> -> vector<8x128xf32>
    %c2_14 = arith.constant 2 : index
    %c0_15 = arith.constant 0 : index
    %16 = vector.load %arg3[%c2_14, %c0_15] : memref<8x128xf32, #tpu.memory_space<vmem>>, vector<1x128xf32>
    %17 = vector.broadcast %16 : vector<1x128xf32> to vector<8x128xf32>
    %18 = arith.addf %15, %17 : vector<8x128xf32>
    %c3 = arith.constant 3 : index
    %c0_16 = arith.constant 0 : index
    %c0_17 = arith.constant 0 : index
    %19 = vector.load %arg1[%c3, %c0_16, %c0_17] : memref<6x128x128xf32, #tpu.memory_space<vmem>>, vector<1x128x128xf32>
    %20 = vector.shape_cast %19 : vector<1x128x128xf32> to vector<128x128xf32>
    %cst_18 = arith.constant dense<0.000000e+00> : vector<8x128xf32>
    %21 = tpu.matmul %18, %20, %cst_18 {dimension_numbers = #tpu.dot_dimension_numbers<[1], [0], [0], [1], [0, 0, 1, 1], [], []>} : vector<8x128xf32>, vector<128x128xf32>, vector<8x128xf32> -> vector<8x128xf32>
    %c3_19 = arith.constant 3 : index
    %c0_20 = arith.constant 0 : index
    %22 = vector.load %arg3[%c3_19, %c0_20] : memref<8x128xf32, #tpu.memory_space<vmem>>, vector<1x128xf32>
    %23 = vector.broadcast %22 : vector<1x128xf32> to vector<8x128xf32>
    %24 = arith.addf %21, %23 : vector<8x128xf32>
    %c4 = arith.constant 4 : index
    %c0_21 = arith.constant 0 : index
    %c0_22 = arith.constant 0 : index
    %25 = vector.load %arg1[%c4, %c0_21, %c0_22] : memref<6x128x128xf32, #tpu.memory_space<vmem>>, vector<1x128x128xf32>
    %26 = vector.shape_cast %25 : vector<1x128x128xf32> to vector<128x128xf32>
    %cst_23 = arith.constant dense<0.000000e+00> : vector<8x128xf32>
    %27 = tpu.matmul %24, %26, %cst_23 {dimension_numbers = #tpu.dot_dimension_numbers<[1], [0], [0], [1], [0, 0, 1, 1], [], []>} : vector<8x128xf32>, vector<128x128xf32>, vector<8x128xf32> -> vector<8x128xf32>
    %c4_24 = arith.constant 4 : index
    %c0_25 = arith.constant 0 : index
    %28 = vector.load %arg3[%c4_24, %c0_25] : memref<8x128xf32, #tpu.memory_space<vmem>>, vector<1x128xf32>
    %29 = vector.broadcast %28 : vector<1x128xf32> to vector<8x128xf32>
    %30 = arith.addf %27, %29 : vector<8x128xf32>
    %c5 = arith.constant 5 : index
    %c0_26 = arith.constant 0 : index
    %c0_27 = arith.constant 0 : index
    %31 = vector.load %arg1[%c5, %c0_26, %c0_27] : memref<6x128x128xf32, #tpu.memory_space<vmem>>, vector<1x128x128xf32>
    %32 = vector.shape_cast %31 : vector<1x128x128xf32> to vector<128x128xf32>
    %cst_28 = arith.constant dense<0.000000e+00> : vector<8x128xf32>
    %33 = tpu.matmul %30, %32, %cst_28 {dimension_numbers = #tpu.dot_dimension_numbers<[1], [0], [0], [1], [0, 0, 1, 1], [], []>} : vector<8x128xf32>, vector<128x128xf32>, vector<8x128xf32> -> vector<8x128xf32>
    %c5_29 = arith.constant 5 : index
    %c0_30 = arith.constant 0 : index
    %34 = vector.load %arg3[%c5_29, %c0_30] : memref<8x128xf32, #tpu.memory_space<vmem>>, vector<1x128xf32>
    %35 = vector.broadcast %34 : vector<1x128xf32> to vector<8x128xf32>
    %36 = arith.addf %33, %35 : vector<8x128xf32>
    %c0_31 = arith.constant 0 : index
    %c0_32 = arith.constant 0 : index
    %37 = vector.load %arg2[%c0_31, %c0_32] : memref<128x256xf32, #tpu.memory_space<vmem>>, vector<128x256xf32>
    %cst_33 = arith.constant dense<0.000000e+00> : vector<8x256xf32>
    %38 = tpu.matmul %36, %37, %cst_33 {dimension_numbers = #tpu.dot_dimension_numbers<[1], [0], [0], [1], [0, 0, 1, 1], [], []>} : vector<8x128xf32>, vector<128x256xf32>, vector<8x256xf32> -> vector<8x256xf32>
    %c0_34 = arith.constant 0 : index
    %c0_35 = arith.constant 0 : index
    %39 = vector.load %arg4[%c0_34, %c0_35] : memref<1x256xf32, #tpu.memory_space<vmem>>, vector<1x256xf32>
    %40 = vector.broadcast %39 : vector<1x256xf32> to vector<8x256xf32>
    %41 = arith.addf %38, %40 : vector<8x256xf32>
    %42 = arith.addf %41, %41 : vector<8x256xf32>
    %c0_36 = arith.constant 0 : index
    %c0_37 = arith.constant 0 : index
    %43 = vector.load %arg5[%c0_36, %c0_37] : memref<8x256xf32, #tpu.memory_space<vmem>>, vector<8x256xf32>
    tpu.vector_store %arg5[%c0_36, %c0_37], %42 {strides = array<i32>} : memref<8x256xf32, #tpu.memory_space<vmem>>, vector<8x256xf32>,
    return
  }
}

</mosaic_0001>

<llo_original>
// kernel: model_forward.1
$region0: #{model_forward.1}
  #allocation0 [shape = 'u32[]', space=smem, size = 0x4, offset = 0x4, fixed_abs, tag = 'smem constant byte address 0x4 - core index']
  #allocation1 [shape = 'u32[144,128]{1,0:T(1,128)}', space=vmem, size = 0x12000, scoped, tag = 'internal scratch']
  %s0 = inlined_call_operand.vmem [shape: f32[8,128], index: 0, kind: input, shape index: {}]
  %s1 = inlined_call_operand.vmem [shape: f32[6,128,128], index: 1, kind: input, shape index: {}]
  %s2 = inlined_call_operand.vmem [shape: f32[128,256], index: 2, kind: input, shape index: {}]
  %s3 = inlined_call_operand.vmem [shape: f32[8,128], index: 3, kind: input, shape index: {}]
  %s4 = inlined_call_operand.vmem [shape: f32[1,256], index: 4, kind: input, shape index: {}]
  %s5 = inlined_call_operand.vmem [shape: f32[8,256], index: 5, kind: output, shape index: {}]
  %s6 = sld [smem:[#allocation0]]
  $region30: #{model_forward.1} parent=0
    _
  %s8 = ssub.s32 1, %s6
  %s9 = scalar_select 0, %s8, %s6
  // Predicated region
  $region2: #{model_forward.1} parent=0 // pred_check
    _
  $region3: #{model_forward.1} parent=0 // pred_check_branch
    %11 = sbr.rel (0) target = $region5
  $region4: #{model_forward.1} parent=0 // pred_region
    _
  $region5: #{model_forward.1} parent=0 // pred_fallthru
    _
  // Predicated region
  $region6: #{model_forward.1} parent=0 // pred_check
    _
  $region7: #{model_forward.1} parent=0 // pred_check_branch
    %13 = sbr.rel (0) target = $region9
  $region8: #{model_forward.1} parent=0 // pred_region
    _
  $region9: #{model_forward.1} parent=0 // pred_fallthru
    _
  // Predicated region
  $region10: #{model_forward.1} parent=0 // pred_check
    _
  $region11: #{model_forward.1} parent=0 // pred_check_branch
    %15 = sbr.rel (0) target = $region13
  $region12: #{model_forward.1} parent=0 // pred_region
    _
  $region13: #{model_forward.1} parent=0 // pred_fallthru
    _
  // Predicated region
  $region14: #{model_forward.1} parent=0 // pred_check
    _
  $region15: #{model_forward.1} parent=0 // pred_check_branch
    %17 = sbr.rel (0) target = $region17
  $region16: #{model_forward.1} parent=0 // pred_region
    _
  $region17: #{model_forward.1} parent=0 // pred_fallthru
    _
  // Predicated region
  $region18: #{model_forward.1} parent=0 // pred_check
    _
  $region19: #{model_forward.1} parent=0 // pred_check_branch
    %19 = sbr.rel (0) target = $region21
  $region20: #{model_forward.1} parent=0 // pred_region
    _
  $region21: #{model_forward.1} parent=0 // pred_fallthru
    _
  %v20 = vld [vmem:[%s0] sm:$0xff]
  %v21 = vld [vmem:[%s1] sm:$0xff]
  %v22 = vld [vmem:[%s1 + $0x8] sm:$0xff]
  %v23 = vld [vmem:[%s1 + $0x10] sm:$0xff]
  %v24 = vld [vmem:[%s1 + $0x18] sm:$0xff]
  %v25 = vld [vmem:[%s1 + $0x20] sm:$0xff]
  %v26 = vld [vmem:[%s1 + $0x28] sm:$0xff]
  %v27 = vld [vmem:[%s1 + $0x30] sm:$0xff]
  %v28 = vld [vmem:[%s1 + $0x38] sm:$0xff]
  %v29 = vld [vmem:[%s1 + $0x40] sm:$0xff]
  %v30 = vld [vmem:[%s1 + $0x48] sm:$0xff]
  %v31 = vld [vmem:[%s1 + $0x50] sm:$0xff]
  %v32 = vld [vmem:[%s1 + $0x58] sm:$0xff]
  %v33 = vld [vmem:[%s1 + $0x60] sm:$0xff]
  %v34 = vld [vmem:[%s1 + $0x68] sm:$0xff]
  %v35 = vld [vmem:[%s1 + $0x70] sm:$0xff]
  %v36 = vld [vmem:[%s1 + $0x78] sm:$0xff]
  %v37 = vld [vmem:[%s3] sm:$0x1]
  %v38 = vlaneseq
  %v39 = vshrl.u32 %v38, 7
  %v40 = vsub.s32 0, %v39
  %v41 = vrot.slane %v37, %v40
  %42 = vmatprep.subr.mxu0 0.0
  %43 = vmatpush1.msra.mxu0 %v36
  %44 = vmatprep.subr.mxu0 0.0
  %45 = vmatpush1.msra.mxu0 %v35
  %46 = vmatprep.subr.mxu0 0.0
  %47 = vmatpush1.msra.mxu0 %v34
  %48 = vmatprep.subr.mxu0 0.0
  %49 = vmatpush1.msra.mxu0 %v33
  %50 = vmatprep.subr.mxu0 0.0
  %51 = vmatpush1.msra.mxu0 %v32
  %52 = vmatprep.subr.mxu0 0.0
  %53 = vmatpush1.msra.mxu0 %v31
  %54 = vmatprep.subr.mxu0 0.0
  %55 = vmatpush1.msra.mxu0 %v30
  %56 = vmatprep.subr.mxu0 0.0
  %57 = vmatpush1.msra.mxu0 %v29
  %58 = vmatprep.subr.mxu0 0.0
  %59 = vmatpush1.msra.mxu0 %v28
  %60 = vmatprep.subr.mxu0 0.0
  %61 = vmatpush1.msra.mxu0 %v27
  %62 = vmatprep.subr.mxu0 0.0
  %63 = vmatpush1.msra.mxu0 %v26
  %64 = vmatprep.subr.mxu0 0.0
  %65 = vmatpush1.msra.mxu0 %v25
  %66 = vmatprep.subr.mxu0 0.0
  %67 = vmatpush1.msra.mxu0 %v24
  %68 = vmatprep.subr.mxu0 0.0
  %69 = vmatpush1.msra.mxu0 %v23
  %70 = vmatprep.subr.mxu0 0.0
  %71 = vmatpush1.msra.mxu0 %v22
  %72 = vmatprep.subr.mxu0 0.0
  %73 = vmatpush1.msra.mxu0 %v21
  %74 = vmatprep.subr.mxu0 0.0
  %75 = vmatpush2.msra.mxu0 0.0
  %76 = vmatprep.subr.mxu0 0.0
  %77 = vmatpush2.msra.mxu0 0.0
  %78 = vmatprep.subr.mxu0 0.0
  %79 = vmatpush2.msra.mxu0 0.0
  %80 = vmatprep.subr.mxu0 0.0
  %81 = vmatpush2.msra.mxu0 0.0
  %82 = vmatprep.subr.mxu0 0.0
  %83 = vmatpush2.msra.mxu0 0.0
  %84 = vmatprep.subr.mxu0 0.0
  %85 = vmatpush2.msra.mxu0 0.0
  %86 = vmatprep.subr.mxu0 0.0
  %87 = vmatpush2.msra.mxu0 0.0
  %88 = vmatprep.subr.mxu0 0.0
  %89 = vmatpush2.msra.mxu0 0.0
  %90 = vmatprep.subr.mxu0 0.0
  %91 = vmatpush2.msra.mxu0 0.0
  %92 = vmatprep.subr.mxu0 0.0
  %93 = vmatpush2.msra.mxu0 0.0
  %94 = vmatprep.subr.mxu0 0.0
  %95 = vmatpush2.msra.mxu0 0.0
  %96 = vmatprep.subr.mxu0 0.0
  %97 = vmatpush2.msra.mxu0 0.0
  %98 = vmatprep.subr.mxu0 0.0
  %99 = vmatpush2.msra.mxu0 0.0
  %100 = vmatprep.subr.mxu0 0.0
  %101 = vmatpush2.msra.mxu0 0.0
  %102 = vmatprep.subr.mxu0 0.0
  %103 = vmatpush2.msra.mxu0 0.0
  %104 = vmatprep.subr.mxu0 0.0
  %105 = vmatpush2.msra.mxu0 0.0
  %106 = vmatprep.mubr.f32.mxu0 0.0
  %107 = vmatmul.mubr.f32.gmra.mxu0 %v20
  %v108 = vpop.f32.mrf.mxu0
  %v109 = vadd.f32 %v41, %v108
  %v110 = vpop.f32.mrf.mxu0
  %111 = vdwg.mxu0
  %s112 = scalar_lea.vmem %s1, 128
  %v113 = vld [vmem:[%s112] sm:$0xff]
  %v114 = vld [vmem:[%s112 + $0x8] sm:$0xff]
  %v115 = vld [vmem:[%s112 + $0x10] sm:$0xff]
  %v116 = vld [vmem:[%s112 + $0x18] sm:$0xff]
  %v117 = vld [vmem:[%s112 + $0x20] sm:$0xff]
  %v118 = vld [vmem:[%s112 + $0x28] sm:$0xff]
  %v119 = vld [vmem:[%s112 + $0x30] sm:$0xff]
  %v120 = vld [vmem:[%s112 + $0x38] sm:$0xff]
  %v121 = vld [vmem:[%s112 + $0x40] sm:$0xff]
  %v122 = vld [vmem:[%s112 + $0x48] sm:$0xff]
  %v123 = vld [vmem:[%s112 + $0x50] sm:$0xff]
  %v124 = vld [vmem:[%s112 + $0x58] sm:$0xff]
  %v125 = vld [vmem:[%s112 + $0x60] sm:$0xff]
  %v126 = vld [vmem:[%s112 + $0x68] sm:$0xff]
  %v127 = vld [vmem:[%s112 + $0x70] sm:$0xff]
  %v128 = vld [vmem:[%s112 + $0x78] sm:$0xff]
  %v129 = vld [vmem:[%s3 + $0x1] sm:$0x1]
  %v130 = vlaneseq
  %v131 = vshrl.u32 %v130, 7
  %v132 = vsub.s32 0, %v131
  %v133 = vrot.slane %v129, %v132
  %134 = vmatprep.subr.mxu0 0.0
  %135 = vmatpush1.msra.mxu0 %v128
  %136 = vmatprep.subr.mxu0 0.0
  %137 = vmatpush1.msra.mxu0 %v127
  %138 = vmatprep.subr.mxu0 0.0
  %139 = vmatpush1.msra.mxu0 %v126
  %140 = vmatprep.subr.mxu0 0.0
  %141 = vmatpush1.msra.mxu0 %v125
  %142 = vmatprep.subr.mxu0 0.0
  %143 = vmatpush1.msra.mxu0 %v124
  %144 = vmatprep.subr.mxu0 0.0
  %145 = vmatpush1.msra.mxu0 %v123
  %146 = vmatprep.subr.mxu0 0.0
  %147 = vmatpush1.msra.mxu0 %v122
  %148 = vmatprep.subr.mxu0 0.0
  %149 = vmatpush1.msra.mxu0 %v121
  %150 = vmatprep.subr.mxu0 0.0
  %151 = vmatpush1.msra.mxu0 %v120
  %152 = vmatprep.subr.mxu0 0.0
  %153 = vmatpush1.msra.mxu0 %v119
  %154 = vmatprep.subr.mxu0 0.0
  %155 = vmatpush1.msra.mxu0 %v118
  %156 = vmatprep.subr.mxu0 0.0
  %157 = vmatpush1.msra.mxu0 %v117
  %158 = vmatprep.subr.mxu0 0.0
  %159 = vmatpush1.msra.mxu0 %v116
  %160 = vmatprep.subr.mxu0 0.0
  %161 = vmatpush1.msra.mxu0 %v115
  %162 = vmatprep.subr.mxu0 0.0
  %163 = vmatpush1.msra.mxu0 %v114
  %164 = vmatprep.subr.mxu0 0.0
  %165 = vmatpush1.msra.mxu0 %v113
  %166 = vmatprep.subr.mxu0 0.0
  %167 = vmatpush2.msra.mxu0 0.0
  %168 = vmatprep.subr.mxu0 0.0
  %169 = vmatpush2.msra.mxu0 0.0
  %170 = vmatprep.subr.mxu0 0.0
  %171 = vmatpush2.msra.mxu0 0.0
  %172 = vmatprep.subr.mxu0 0.0
  %173 = vmatpush2.msra.mxu0 0.0
  %174 = vmatprep.subr.mxu0 0.0
  %175 = vmatpush2.msra.mxu0 0.0
  %176 = vmatprep.subr.mxu0 0.0
  %177 = vmatpush2.msra.mxu0 0.0
  %178 = vmatprep.subr.mxu0 0.0
  %179 = vmatpush2.msra.mxu0 0.0
  %180 = vmatprep.subr.mxu0 0.0
  %181 = vmatpush2.msra.mxu0 0.0
  %182 = vmatprep.subr.mxu0 0.0
  %183 = vmatpush2.msra.mxu0 0.0
  %184 = vmatprep.subr.mxu0 0.0
  %185 = vmatpush2.msra.mxu0 0.0
  %186 = vmatprep.subr.mxu0 0.0
  %187 = vmatpush2.msra.mxu0 0.0
  %188 = vmatprep.subr.mxu0 0.0
  %189 = vmatpush2.msra.mxu0 0.0
  %190 = vmatprep.subr.mxu0 0.0
  %191 = vmatpush2.msra.mxu0 0.0
  %192 = vmatprep.subr.mxu0 0.0
  %193 = vmatpush2.msra.mxu0 0.0
  %194 = vmatprep.subr.mxu0 0.0
  %195 = vmatpush2.msra.mxu0 0.0
  %196 = vmatprep.subr.mxu0 0.0
  %197 = vmatpush2.msra.mxu0 0.0
  %198 = vmatprep.mubr.f32.mxu0 0.0
  %199 = vmatmul.mubr.f32.gmra.mxu0 %v109
  %v200 = vpop.f32.mrf.mxu0
  %v201 = vadd.f32 %v133, %v200
  %v202 = vpop.f32.mrf.mxu0
  %203 = vdwg.mxu0
  %s204 = scalar_lea.vmem %s1, 256
  %v205 = vld [vmem:[%s204] sm:$0xff]
  %v206 = vld [vmem:[%s204 + $0x8] sm:$0xff]
  %v207 = vld [vmem:[%s204 + $0x10] sm:$0xff]
  %v208 = vld [vmem:[%s204 + $0x18] sm:$0xff]
  %v209 = vld [vmem:[%s204 + $0x20] sm:$0xff]
  %v210 = vld [vmem:[%s204 + $0x28] sm:$0xff]
  %v211 = vld [vmem:[%s204 + $0x30] sm:$0xff]
  %v212 = vld [vmem:[%s204 + $0x38] sm:$0xff]
  %v213 = vld [vmem:[%s204 + $0x40] sm:$0xff]
  %v214 = vld [vmem:[%s204 + $0x48] sm:$0xff]
  %v215 = vld [vmem:[%s204 + $0x50] sm:$0xff]
  %v216 = vld [vmem:[%s204 + $0x58] sm:$0xff]
  %v217 = vld [vmem:[%s204 + $0x60] sm:$0xff]
  %v218 = vld [vmem:[%s204 + $0x68] sm:$0xff]
  %v219 = vld [vmem:[%s204 + $0x70] sm:$0xff]
  %v220 = vld [vmem:[%s204 + $0x78] sm:$0xff]
  %v221 = vld [vmem:[%s3 + $0x2] sm:$0x1]
  %v222 = vlaneseq
  %v223 = vshrl.u32 %v222, 7
  %v224 = vsub.s32 0, %v223
  %v225 = vrot.slane %v221, %v224
  %226 = vmatprep.subr.mxu0 0.0
  %227 = vmatpush1.msra.mxu0 %v220
  %228 = vmatprep.subr.mxu0 0.0
  %229 = vmatpush1.msra.mxu0 %v219
  %230 = vmatprep.subr.mxu0 0.0
  %231 = vmatpush1.msra.mxu0 %v218
  %232 = vmatprep.subr.mxu0 0.0
  %233 = vmatpush1.msra.mxu0 %v217
  %234 = vmatprep.subr.mxu0 0.0
  %235 = vmatpush1.msra.mxu0 %v216
  %236 = vmatprep.subr.mxu0 0.0
  %237 = vmatpush1.msra.mxu0 %v215
  %238 = vmatprep.subr.mxu0 0.0
  %239 = vmatpush1.msra.mxu0 %v214
  %240 = vmatprep.subr.mxu0 0.0
  %241 = vmatpush1.msra.mxu0 %v213
  %242 = vmatprep.subr.mxu0 0.0
  %243 = vmatpush1.msra.mxu0 %v212
  %244 = vmatprep.subr.mxu0 0.0
  %245 = vmatpush1.msra.mxu0 %v211
  %246 = vmatprep.subr.mxu0 0.0
  %247 = vmatpush1.msra.mxu0 %v210
  %248 = vmatprep.subr.mxu0 0.0
  %249 = vmatpush1.msra.mxu0 %v209
  %250 = vmatprep.subr.mxu0 0.0
  %251 = vmatpush1.msra.mxu0 %v208
  %252 = vmatprep.subr.mxu0 0.0
  %253 = vmatpush1.msra.mxu0 %v207
  %254 = vmatprep.subr.mxu0 0.0
  %255 = vmatpush1.msra.mxu0 %v206
  %256 = vmatprep.subr.mxu0 0.0
  %257 = vmatpush1.msra.mxu0 %v205
  %258 = vmatprep.subr.mxu0 0.0
  %259 = vmatpush2.msra.mxu0 0.0
  %260 = vmatprep.subr.mxu0 0.0
  %261 = vmatpush2.msra.mxu0 0.0
  %262 = vmatprep.subr.mxu0 0.0
  %263 = vmatpush2.msra.mxu0 0.0
  %264 = vmatprep.subr.mxu0 0.0
  %265 = vmatpush2.msra.mxu0 0.0
  %266 = vmatprep.subr.mxu0 0.0
  %267 = vmatpush2.msra.mxu0 0.0
  %268 = vmatprep.subr.mxu0 0.0
  %269 = vmatpush2.msra.mxu0 0.0
  %270 = vmatprep.subr.mxu0 0.0
  %271 = vmatpush2.msra.mxu0 0.0
  %272 = vmatprep.subr.mxu0 0.0
  %273 = vmatpush2.msra.mxu0 0.0
  %274 = vmatprep.subr.mxu0 0.0
  %275 = vmatpush2.msra.mxu0 0.0
  %276 = vmatprep.subr.mxu0 0.0
  %277 = vmatpush2.msra.mxu0 0.0
  %278 = vmatprep.subr.mxu0 0.0
  %279 = vmatpush2.msra.mxu0 0.0
  %280 = vmatprep.subr.mxu0 0.0
  %281 = vmatpush2.msra.mxu0 0.0
  %282 = vmatprep.subr.mxu0 0.0
  %283 = vmatpush2.msra.mxu0 0.0
  %284 = vmatprep.subr.mxu0 0.0
  %285 = vmatpush2.msra.mxu0 0.0
  %286 = vmatprep.subr.mxu0 0.0
  %287 = vmatpush2.msra.mxu0 0.0
  %288 = vmatprep.subr.mxu0 0.0
  %289 = vmatpush2.msra.mxu0 0.0
  %290 = vmatprep.mubr.f32.mxu0 0.0
  %291 = vmatmul.mubr.f32.gmra.mxu0 %v201
  %v292 = vpop.f32.mrf.mxu0
  %v293 = vadd.f32 %v225, %v292
  %v294 = vpop.f32.mrf.mxu0
  %295 = vdwg.mxu0
  %s296 = scalar_lea.vmem %s1, 384
  %v297 = vld [vmem:[%s296] sm:$0xff]
  %v298 = vld [vmem:[%s296 + $0x8] sm:$0xff]
  %v299 = vld [vmem:[%s296 + $0x10] sm:$0xff]
  %v300 = vld [vmem:[%s296 + $0x18] sm:$0xff]
  %v301 = vld [vmem:[%s296 + $0x20] sm:$0xff]
  %v302 = vld [vmem:[%s296 + $0x28] sm:$0xff]
  %v303 = vld [vmem:[%s296 + $0x30] sm:$0xff]
  %v304 = vld [vmem:[%s296 + $0x38] sm:$0xff]
  %v305 = vld [vmem:[%s296 + $0x40] sm:$0xff]
  %v306 = vld [vmem:[%s296 + $0x48] sm:$0xff]
  %v307 = vld [vmem:[%s296 + $0x50] sm:$0xff]
  %v308 = vld [vmem:[%s296 + $0x58] sm:$0xff]
  %v309 = vld [vmem:[%s296 + $0x60] sm:$0xff]
  %v310 = vld [vmem:[%s296 + $0x68] sm:$0xff]
  %v311 = vld [vmem:[%s296 + $0x70] sm:$0xff]
  %v312 = vld [vmem:[%s296 + $0x78] sm:$0xff]
  %v313 = vld [vmem:[%s3 + $0x3] sm:$0x1]
  %v314 = vlaneseq
  %v315 = vshrl.u32 %v314, 7
  %v316 = vsub.s32 0, %v315
  %v317 = vrot.slane %v313, %v316
  %318 = vmatprep.subr.mxu0 0.0
  %319 = vmatpush1.msra.mxu0 %v312
  %320 = vmatprep.subr.mxu0 0.0
  %321 = vmatpush1.msra.mxu0 %v311
  %322 = vmatprep.subr.mxu0 0.0
  %323 = vmatpush1.msra.mxu0 %v310
  %324 = vmatprep.subr.mxu0 0.0
  %325 = vmatpush1.msra.mxu0 %v309
  %326 = vmatprep.subr.mxu0 0.0
  %327 = vmatpush1.msra.mxu0 %v308
  %328 = vmatprep.subr.mxu0 0.0
  %329 = vmatpush1.msra.mxu0 %v307
  %330 = vmatprep.subr.mxu0 0.0
  %331 = vmatpush1.msra.mxu0 %v306
  %332 = vmatprep.subr.mxu0 0.0
  %333 = vmatpush1.msra.mxu0 %v305
  %334 = vmatprep.subr.mxu0 0.0
  %335 = vmatpush1.msra.mxu0 %v304
  %336 = vmatprep.subr.mxu0 0.0
  %337 = vmatpush1.msra.mxu0 %v303
  %338 = vmatprep.subr.mxu0 0.0
  %339 = vmatpush1.msra.mxu0 %v302
  %340 = vmatprep.subr.mxu0 0.0
  %341 = vmatpush1.msra.mxu0 %v301
  %342 = vmatprep.subr.mxu0 0.0
  %343 = vmatpush1.msra.mxu0 %v300
  %344 = vmatprep.subr.mxu0 0.0
  %345 = vmatpush1.msra.mxu0 %v299
  %346 = vmatprep.subr.mxu0 0.0
  %347 = vmatpush1.msra.mxu0 %v298
  %348 = vmatprep.subr.mxu0 0.0
  %349 = vmatpush1.msra.mxu0 %v297
  %350 = vmatprep.subr.mxu0 0.0
  %351 = vmatpush2.msra.mxu0 0.0
  %352 = vmatprep.subr.mxu0 0.0
  %353 = vmatpush2.msra.mxu0 0.0
  %354 = vmatprep.subr.mxu0 0.0
  %355 = vmatpush2.msra.mxu0 0.0
  %356 = vmatprep.subr.mxu0 0.0
  %357 = vmatpush2.msra.mxu0 0.0
  %358 = vmatprep.subr.mxu0 0.0
  %359 = vmatpush2.msra.mxu0 0.0
  %360 = vmatprep.subr.mxu0 0.0
  %361 = vmatpush2.msra.mxu0 0.0
  %362 = vmatprep.subr.mxu0 0.0
  %363 = vmatpush2.msra.mxu0 0.0
  %364 = vmatprep.subr.mxu0 0.0
  %365 = vmatpush2.msra.mxu0 0.0
  %366 = vmatprep.subr.mxu0 0.0
  %367 = vmatpush2.msra.mxu0 0.0
  %368 = vmatprep.subr.mxu0 0.0
  %369 = vmatpush2.msra.mxu0 0.0
  %370 = vmatprep.subr.mxu0 0.0
  %371 = vmatpush2.msra.mxu0 0.0
  %372 = vmatprep.subr.mxu0 0.0
  %373 = vmatpush2.msra.mxu0 0.0
  %374 = vmatprep.subr.mxu0 0.0
  %375 = vmatpush2.msra.mxu0 0.0
  %376 = vmatprep.subr.mxu0 0.0
  %377 = vmatpush2.msra.mxu0 0.0
  %378 = vmatprep.subr.mxu0 0.0
  %379 = vmatpush2.msra.mxu0 0.0
  %380 = vmatprep.subr.mxu0 0.0
  %381 = vmatpush2.msra.mxu0 0.0
  %382 = vmatprep.mubr.f32.mxu0 0.0
  %383 = vmatmul.mubr.f32.gmra.mxu0 %v293
  %v384 = vpop.f32.mrf.mxu0
  %v385 = vadd.f32 %v317, %v384
  %v386 = vpop.f32.mrf.mxu0
  %387 = vdwg.mxu0
  %s388 = scalar_lea.vmem %s1, 512
  %v389 = vld [vmem:[%s388] sm:$0xff]
  %v390 = vld [vmem:[%s388 + $0x8] sm:$0xff]
  %v391 = vld [vmem:[%s388 + $0x10] sm:$0xff]
  %v392 = vld [vmem:[%s388 + $0x18] sm:$0xff]
  %v393 = vld [vmem:[%s388 + $0x20] sm:$0xff]
  %v394 = vld [vmem:[%s388 + $0x28] sm:$0xff]
  %v395 = vld [vmem:[%s388 + $0x30] sm:$0xff]
  %v396 = vld [vmem:[%s388 + $0x38] sm:$0xff]
  %v397 = vld [vmem:[%s388 + $0x40] sm:$0xff]
  %v398 = vld [vmem:[%s388 + $0x48] sm:$0xff]
  %v399 = vld [vmem:[%s388 + $0x50] sm:$0xff]
  %v400 = vld [vmem:[%s388 + $0x58] sm:$0xff]
  %v401 = vld [vmem:[%s388 + $0x60] sm:$0xff]
  %v402 = vld [vmem:[%s388 + $0x68] sm:$0xff]
  %v403 = vld [vmem:[%s388 + $0x70] sm:$0xff]
  %v404 = vld [vmem:[%s388 + $0x78] sm:$0xff]
  %v405 = vld [vmem:[%s3 + $0x4] sm:$0x1]
  %v406 = vlaneseq
  %v407 = vshrl.u32 %v406, 7
  %v408 = vsub.s32 0, %v407
  %v409 = vrot.slane %v405, %v408
  %410 = vmatprep.subr.mxu0 0.0
  %411 = vmatpush1.msra.mxu0 %v404
  %412 = vmatprep.subr.mxu0 0.0
  %413 = vmatpush1.msra.mxu0 %v403
  %414 = vmatprep.subr.mxu0 0.0
  %415 = vmatpush1.msra.mxu0 %v402
  %416 = vmatprep.subr.mxu0 0.0
  %417 = vmatpush1.msra.mxu0 %v401
  %418 = vmatprep.subr.mxu0 0.0
  %419 = vmatpush1.msra.mxu0 %v400
  %420 = vmatprep.subr.mxu0 0.0
  %421 = vmatpush1.msra.mxu0 %v399
  %422 = vmatprep.subr.mxu0 0.0
  %423 = vmatpush1.msra.mxu0 %v398
  %424 = vmatprep.subr.mxu0 0.0
  %425 = vmatpush1.msra.mxu0 %v397
  %426 = vmatprep.subr.mxu0 0.0
  %427 = vmatpush1.msra.mxu0 %v396
  %428 = vmatprep.subr.mxu0 0.0
  %429 = vmatpush1.msra.mxu0 %v395
  %430 = vmatprep.subr.mxu0 0.0
  %431 = vmatpush1.msra.mxu0 %v394
  %432 = vmatprep.subr.mxu0 0.0
  %433 = vmatpush1.msra.mxu0 %v393
  %434 = vmatprep.subr.mxu0 0.0
  %435 = vmatpush1.msra.mxu0 %v392
  %436 = vmatprep.subr.mxu0 0.0
  %437 = vmatpush1.msra.mxu0 %v391
  %438 = vmatprep.subr.mxu0 0.0
  %439 = vmatpush1.msra.mxu0 %v390
  %440 = vmatprep.subr.mxu0 0.0
  %441 = vmatpush1.msra.mxu0 %v389
  %442 = vmatprep.subr.mxu0 0.0
  %443 = vmatpush2.msra.mxu0 0.0
  %444 = vmatprep.subr.mxu0 0.0
  %445 = vmatpush2.msra.mxu0 0.0
  %446 = vmatprep.subr.mxu0 0.0
  %447 = vmatpush2.msra.mxu0 0.0
  %448 = vmatprep.subr.mxu0 0.0
  %449 = vmatpush2.msra.mxu0 0.0
  %450 = vmatprep.subr.mxu0 0.0
  %451 = vmatpush2.msra.mxu0 0.0
  %452 = vmatprep.subr.mxu0 0.0
  %453 = vmatpush2.msra.mxu0 0.0
  %454 = vmatprep.subr.mxu0 0.0
  %455 = vmatpush2.msra.mxu0 0.0
  %456 = vmatprep.subr.mxu0 0.0
  %457 = vmatpush2.msra.mxu0 0.0
  %458 = vmatprep.subr.mxu0 0.0
  %459 = vmatpush2.msra.mxu0 0.0
  %460 = vmatprep.subr.mxu0 0.0
  %461 = vmatpush2.msra.mxu0 0.0
  %462 = vmatprep.subr.mxu0 0.0
  %463 = vmatpush2.msra.mxu0 0.0
  %464 = vmatprep.subr.mxu0 0.0
  %465 = vmatpush2.msra.mxu0 0.0
  %466 = vmatprep.subr.mxu0 0.0
  %467 = vmatpush2.msra.mxu0 0.0
  %468 = vmatprep.subr.mxu0 0.0
  %469 = vmatpush2.msra.mxu0 0.0
  %470 = vmatprep.subr.mxu0 0.0
  %471 = vmatpush2.msra.mxu0 0.0
  %472 = vmatprep.subr.mxu0 0.0
  %473 = vmatpush2.msra.mxu0 0.0
  %474 = vmatprep.mubr.f32.mxu0 0.0
  %475 = vmatmul.mubr.f32.gmra.mxu0 %v385
  %v476 = vpop.f32.mrf.mxu0
  %v477 = vadd.f32 %v409, %v476
  %v478 = vpop.f32.mrf.mxu0
  %479 = vdwg.mxu0
  %s480 = scalar_lea.vmem %s1, 640
  %v481 = vld [vmem:[%s480] sm:$0xff]
  %v482 = vld [vmem:[%s480 + $0x8] sm:$0xff]
  %v483 = vld [vmem:[%s480 + $0x10] sm:$0xff]
  %v484 = vld [vmem:[%s480 + $0x18] sm:$0xff]
  %v485 = vld [vmem:[%s480 + $0x20] sm:$0xff]
  %v486 = vld [vmem:[%s480 + $0x28] sm:$0xff]
  %v487 = vld [vmem:[%s480 + $0x30] sm:$0xff]
  %v488 = vld [vmem:[%s480 + $0x38] sm:$0xff]
  %v489 = vld [vmem:[%s480 + $0x40] sm:$0xff]
  %v490 = vld [vmem:[%s480 + $0x48] sm:$0xff]
  %v491 = vld [vmem:[%s480 + $0x50] sm:$0xff]
  %v492 = vld [vmem:[%s480 + $0x58] sm:$0xff]
  %v493 = vld [vmem:[%s480 + $0x60] sm:$0xff]
  %v494 = vld [vmem:[%s480 + $0x68] sm:$0xff]
  %v495 = vld [vmem:[%s480 + $0x70] sm:$0xff]
  %v496 = vld [vmem:[%s480 + $0x78] sm:$0xff]
  %v497 = vld [vmem:[%s3 + $0x5] sm:$0x1]
  %v498 = vlaneseq
  %v499 = vshrl.u32 %v498, 7
  %v500 = vsub.s32 0, %v499
  %v501 = vrot.slane %v497, %v500
  %502 = vmatprep.subr.mxu0 0.0
  %503 = vmatpush1.msra.mxu0 %v496
  %504 = vmatprep.subr.mxu0 0.0
  %505 = vmatpush1.msra.mxu0 %v495
  %506 = vmatprep.subr.mxu0 0.0
  %507 = vmatpush1.msra.mxu0 %v494
  %508 = vmatprep.subr.mxu0 0.0
  %509 = vmatpush1.msra.mxu0 %v493
  %510 = vmatprep.subr.mxu0 0.0
  %511 = vmatpush1.msra.mxu0 %v492
  %512 = vmatprep.subr.mxu0 0.0
  %513 = vmatpush1.msra.mxu0 %v491
  %514 = vmatprep.subr.mxu0 0.0
  %515 = vmatpush1.msra.mxu0 %v490
  %516 = vmatprep.subr.mxu0 0.0
  %517 = vmatpush1.msra.mxu0 %v489
  %518 = vmatprep.subr.mxu0 0.0
  %519 = vmatpush1.msra.mxu0 %v488
  %520 = vmatprep.subr.mxu0 0.0
  %521 = vmatpush1.msra.mxu0 %v487
  %522 = vmatprep.subr.mxu0 0.0
  %523 = vmatpush1.msra.mxu0 %v486
  %524 = vmatprep.subr.mxu0 0.0
  %525 = vmatpush1.msra.mxu0 %v485
  %526 = vmatprep.subr.mxu0 0.0
  %527 = vmatpush1.msra.mxu0 %v484
  %528 = vmatprep.subr.mxu0 0.0
  %529 = vmatpush1.msra.mxu0 %v483
  %530 = vmatprep.subr.mxu0 0.0
  %531 = vmatpush1.msra.mxu0 %v482
  %532 = vmatprep.subr.mxu0 0.0
  %533 = vmatpush1.msra.mxu0 %v481
  %534 = vmatprep.subr.mxu0 0.0
  %535 = vmatpush2.msra.mxu0 0.0
  %536 = vmatprep.subr.mxu0 0.0
  %537 = vmatpush2.msra.mxu0 0.0
  %538 = vmatprep.subr.mxu0 0.0
  %539 = vmatpush2.msra.mxu0 0.0
  %540 = vmatprep.subr.mxu0 0.0
  %541 = vmatpush2.msra.mxu0 0.0
  %542 = vmatprep.subr.mxu0 0.0
  %543 = vmatpush2.msra.mxu0 0.0
  %544 = vmatprep.subr.mxu0 0.0
  %545 = vmatpush2.msra.mxu0 0.0
  %546 = vmatprep.subr.mxu0 0.0
  %547 = vmatpush2.msra.mxu0 0.0
  %548 = vmatprep.subr.mxu0 0.0
  %549 = vmatpush2.msra.mxu0 0.0
  %550 = vmatprep.subr.mxu0 0.0
  %551 = vmatpush2.msra.mxu0 0.0
  %552 = vmatprep.subr.mxu0 0.0
  %553 = vmatpush2.msra.mxu0 0.0
  %554 = vmatprep.subr.mxu0 0.0
  %555 = vmatpush2.msra.mxu0 0.0
  %556 = vmatprep.subr.mxu0 0.0
  %557 = vmatpush2.msra.mxu0 0.0
  %558 = vmatprep.subr.mxu0 0.0
  %559 = vmatpush2.msra.mxu0 0.0
  %560 = vmatprep.subr.mxu0 0.0
  %561 = vmatpush2.msra.mxu0 0.0
  %562 = vmatprep.subr.mxu0 0.0
  %563 = vmatpush2.msra.mxu0 0.0
  %564 = vmatprep.subr.mxu0 0.0
  %565 = vmatpush2.msra.mxu0 0.0
  %566 = vmatprep.mubr.f32.mxu0 0.0
  %567 = vmatmul.mubr.f32.gmra.mxu0 %v477
  %v568 = vpop.f32.mrf.mxu0
  %v569 = vadd.f32 %v501, %v568
  %v570 = vpop.f32.mrf.mxu0
  %571 = vdwg.mxu0
  %v572 = vld [vmem:[%s2] sm:$0xff]
  %v573 = vld [vmem:[%s2 + $0x8] sm:$0xff]
  %v574 = vld [vmem:[%s2 + $0x10] sm:$0xff]
  %v575 = vld [vmem:[%s2 + $0x18] sm:$0xff]
  %v576 = vld [vmem:[%s2 + $0x20] sm:$0xff]
  %v577 = vld [vmem:[%s2 + $0x28] sm:$0xff]
  %v578 = vld [vmem:[%s2 + $0x30] sm:$0xff]
  %v579 = vld [vmem:[%s2 + $0x38] sm:$0xff]
  %v580 = vld [vmem:[%s2 + $0x40] sm:$0xff]
  %v581 = vld [vmem:[%s2 + $0x48] sm:$0xff]
  %v582 = vld [vmem:[%s2 + $0x50] sm:$0xff]
  %v583 = vld [vmem:[%s2 + $0x58] sm:$0xff]
  %v584 = vld [vmem:[%s2 + $0x60] sm:$0xff]
  %v585 = vld [vmem:[%s2 + $0x68] sm:$0xff]
  %v586 = vld [vmem:[%s2 + $0x70] sm:$0xff]
  %v587 = vld [vmem:[%s2 + $0x78] sm:$0xff]
  %v588 = vld [vmem:[%s2 + $0x80] sm:$0xff]
  %v589 = vld [vmem:[%s2 + $0x88] sm:$0xff]
  %v590 = vld [vmem:[%s2 + $0x90] sm:$0xff]
  %v591 = vld [vmem:[%s2 + $0x98] sm:$0xff]
  %v592 = vld [vmem:[%s2 + $0xa0] sm:$0xff]
  %v593 = vld [vmem:[%s2 + $0xa8] sm:$0xff]
  %v594 = vld [vmem:[%s2 + $0xb0] sm:$0xff]
  %v595 = vld [vmem:[%s2 + $0xb8] sm:$0xff]
  %v596 = vld [vmem:[%s2 + $0xc0] sm:$0xff]
  %v597 = vld [vmem:[%s2 + $0xc8] sm:$0xff]
  %v598 = vld [vmem:[%s2 + $0xd0] sm:$0xff]
  %v599 = vld [vmem:[%s2 + $0xd8] sm:$0xff]
  %v600 = vld [vmem:[%s2 + $0xe0] sm:$0xff]
  %v601 = vld [vmem:[%s2 + $0xe8] sm:$0xff]
  %v602 = vld [vmem:[%s2 + $0xf0] sm:$0xff]
  %v603 = vld [vmem:[%s2 + $0xf8] sm:$0xff]
  %v604 = vld [vmem:[%s4] sm:$0x3]
  %v606 = vlaneseq
  %v607 = vshrl.u32 %v606, 7
  %v608 = vsub.s32 0, %v607
  %v609 = vrot.slane %v604, %v608
  %v610 = vlaneseq
  %v611 = vshrl.u32 %v610, 7
  %v612 = vsub.s32 1, %v611
  %v613 = vrot.slane %v604, %v612
  %616 = vmatprep.subr.mxu0 %v603
  %617 = vmatpush1.msra.mxu0 %v602
  %618 = vmatprep.subr.mxu0 %v601
  %619 = vmatpush1.msra.mxu0 %v600
  %620 = vmatprep.subr.mxu0 %v599
  %621 = vmatpush1.msra.mxu0 %v598
  %622 = vmatprep.subr.mxu0 %v597
  %623 = vmatpush1.msra.mxu0 %v596
  %624 = vmatprep.subr.mxu0 %v595
  %625 = vmatpush1.msra.mxu0 %v594
  %626 = vmatprep.subr.mxu0 %v593
  %627 = vmatpush1.msra.mxu0 %v592
  %628 = vmatprep.subr.mxu0 %v591
  %629 = vmatpush1.msra.mxu0 %v590
  %630 = vmatprep.subr.mxu0 %v589
  %631 = vmatpush1.msra.mxu0 %v588
  %632 = vmatprep.subr.mxu0 %v587
  %633 = vmatpush1.msra.mxu0 %v586
  %634 = vmatprep.subr.mxu0 %v585
  %635 = vmatpush1.msra.mxu0 %v584
  %636 = vmatprep.subr.mxu0 %v583
  %637 = vmatpush1.msra.mxu0 %v582
  %638 = vmatprep.subr.mxu0 %v581
  %639 = vmatpush1.msra.mxu0 %v580
  %640 = vmatprep.subr.mxu0 %v579
  %641 = vmatpush1.msra.mxu0 %v578
  %642 = vmatprep.subr.mxu0 %v577
  %643 = vmatpush1.msra.mxu0 %v576
  %644 = vmatprep.subr.mxu0 %v575
  %645 = vmatpush1.msra.mxu0 %v574
  %646 = vmatprep.subr.mxu0 %v573
  %647 = vmatpush1.msra.mxu0 %v572
  %648 = vmatprep.subr.mxu0 0.0
  %649 = vmatpush2.msra.mxu0 0.0
  %650 = vmatprep.subr.mxu0 0.0
  %651 = vmatpush2.msra.mxu0 0.0
  %652 = vmatprep.subr.mxu0 0.0
  %653 = vmatpush2.msra.mxu0 0.0
  %654 = vmatprep.subr.mxu0 0.0
  %655 = vmatpush2.msra.mxu0 0.0
  %656 = vmatprep.subr.mxu0 0.0
  %657 = vmatpush2.msra.mxu0 0.0
  %658 = vmatprep.subr.mxu0 0.0
  %659 = vmatpush2.msra.mxu0 0.0
  %660 = vmatprep.subr.mxu0 0.0
  %661 = vmatpush2.msra.mxu0 0.0
  %662 = vmatprep.subr.mxu0 0.0
  %663 = vmatpush2.msra.mxu0 0.0
  %664 = vmatprep.subr.mxu0 0.0
  %665 = vmatpush2.msra.mxu0 0.0
  %666 = vmatprep.subr.mxu0 0.0
  %667 = vmatpush2.msra.mxu0 0.0
  %668 = vmatprep.subr.mxu0 0.0
  %669 = vmatpush2.msra.mxu0 0.0
  %670 = vmatprep.subr.mxu0 0.0
  %671 = vmatpush2.msra.mxu0 0.0
  %672 = vmatprep.subr.mxu0 0.0
  %673 = vmatpush2.msra.mxu0 0.0
  %674 = vmatprep.subr.mxu0 0.0
  %675 = vmatpush2.msra.mxu0 0.0
  %676 = vmatprep.subr.mxu0 0.0
  %677 = vmatpush2.msra.mxu0 0.0
  %678 = vmatprep.subr.mxu0 0.0
  %679 = vmatpush2.msra.mxu0 0.0
  %680 = vmatprep.mubr.f32.mxu0 0.0
  %681 = vmatmul.mubr.f32.gmra.mxu0 %v569
  %v682 = vpop.f32.mrf.mxu0
  %v683 = vadd.f32 %v609, %v682
  %v684 = vpop.f32.mrf.mxu0
  %v685 = vadd.f32 %v613, %v684
  %686 = vdwg.mxu0
  %v687 = vadd.f32 %v683, %v683
  %v688 = vadd.f32 %v685, %v685
  %689 = vst [vmem:[%s5] sm:$0xff] %v687
  %690 = vst [vmem:[%s5 + $0x8] sm:$0xff] %v688
  // Predicated region
  $region22: #{model_forward.1} parent=0 // pred_check
    _
  $region23: #{model_forward.1} parent=0 // pred_check_branch
    %692 = sbr.rel (0) target = $region25
  $region24: #{model_forward.1} parent=0 // pred_region
    _
  $region25: #{model_forward.1} parent=0 // pred_fallthru
    _
  // Predicated region
  $region26: #{model_forward.1} parent=0 // pred_check
    _
  $region27: #{model_forward.1} parent=0 // pred_check_branch
    %694 = sbr.rel (0) target = $region29
  $region28: #{model_forward.1} parent=0 // pred_region
    _
  $region29: #{model_forward.1} parent=0 // pred_fallthru
    _

</llo_original>
